<compile_context>
chip_gen: v6e
topology: v6e:2x2x1
jax: 0.10.0
libtpu: 0.0.40
codegen_flags: <defaults>
</compile_context>

<pallas_src>
import math
import numpy as np
import jax
import jax.numpy as jnp
from jax.experimental import pallas as pl
from jax.experimental.pallas import tpu as pltpu


def lru_forward_kernel(x_ref, wi_ref, bi_ref, wo_ref, bo_ref, plog_ref,
                       out_ref, y_scr):
    """Fused LRU forward on a single VMEM block.

    Layouts (time-major, prepared by the wrapper):
      x_ref    : (T*B, D)   bf16, row r = t*B + b
      wi_ref   : (D, 2D)    bf16, cols [0:D]=Re, [D:2D]=Im (de-interleaved)
      bi_ref   : (1, 2D)    f32
      wo_ref   : (2D, D)    bf16  (== o_dense.weight.T)
      bo_ref   : (1, D)     f32
      plog_ref : (3, D)     f32   (v_log, theta_log, gamma_log)
      out_ref  : (T, B, D)  f32
      y_scr    : (T*B, 2D)  f32 scratch holding [gamma*Re | gamma*Im]
    """
    T, B, D = out_ref.shape

    # ---- i_dense: one fused bf16 MXU matmul, f32 accumulation ----
    u = jnp.dot(x_ref[...], wi_ref[...],
                preferred_element_type=jnp.float32) + bi_ref[...]     # (T*B, 2D)

    # ---- LRU parameters: params = exp(params_log) (EUP transcendentals) ----
    plog = plog_ref[...]
    v = jnp.exp(plog[0:1, :])                    # (1, D)
    theta = jnp.exp(plog[1:2, :])
    gamma = jnp.exp(plog[2:3, :])
    mag = jnp.exp(-v)
    # Broadcasts hoisted out of the recurrence loop (JAX does not CSE them).
    lam_re = jnp.broadcast_to(mag * jnp.cos(theta), (B, D))   # Re(exp(-v+i*th))
    lam_im = jnp.broadcast_to(mag * jnp.sin(theta), (B, D))   # Im(exp(-v+i*th))
    gam_b = jnp.broadcast_to(gamma, (B, D))

    # ---- complex linear recurrence x_t = lambda * x_{t-1} + u_t (f32) ----
    # Mathematically identical to the reference's log2(L) doubling scan.
    # Fully unrolled: T is small here.
    # TODO(synk): switch to lax.fori_loop(unroll=4..8) once T grows beyond ~16.
    h_re = jnp.zeros((B, D), jnp.float32)
    h_im = jnp.zeros((B, D), jnp.float32)
    for t in range(T):
        u_t = u[t * B:(t + 1) * B, :]                         # (B, 2D)
        nr = lam_re * h_re - lam_im * h_im + u_t[:, 0:D]
        ni = lam_re * h_im + lam_im * h_re + u_t[:, D:2 * D]
        h_re, h_im = nr, ni
        # y_t = gamma * x_t, stored in the exact layout o_dense consumes.
        y_scr[t * B:(t + 1) * B, :] = jnp.concatenate(
            [gam_b * nr, gam_b * ni], axis=-1)

    # ---- o_dense: one fused K=2D bf16 matmul, f32 accumulation ----
    logits = jnp.dot(y_scr[...].astype(jnp.bfloat16), wo_ref[...],
                     preferred_element_type=jnp.float32) + bo_ref[...]  # (T*B, D)

    # ---- activation: torch.softmax(output, dim=0) == softmax over batch ----
    lg = logits.reshape(T, B, D)
    m = jnp.max(lg, axis=1, keepdims=True)
    e = jnp.exp(lg - m)
    s = jnp.sum(e, axis=1, keepdims=True)
    out_ref[...] = e * pl.reciprocal(s, approx=True)


def lru_forward(x, wi, bi, wo, bo, params_log):
    """x: [B,T,D]; wi: [2D,D]; bi: [2D]; wo: [D,2D]; bo: [D]; params_log: [3,D]."""
    B, T, D = x.shape

    # Layout plumbing in the wrapper (free): time-major 2-D activation slab.
    x_tm = jnp.transpose(x, (1, 0, 2)).reshape(T * B, D).astype(jnp.bfloat16)

    # i_dense weight: de-interleave the complex columns of wi.T -> [Re | Im].
    wi_t = wi.T                                                    # (D, 2D)
    wi_cat = jnp.concatenate([wi_t[:, 0::2], wi_t[:, 1::2]],
                             axis=1).astype(jnp.bfloat16)          # (D, 2D)
    bi_cat = jnp.concatenate([bi[0::2], bi[1::2]])[None, :]        # (1, 2D) f32

    wo_cat = wo.T.astype(jnp.bfloat16)                             # (2D, D)
    bo2 = bo[None, :]                                              # (1, D)  f32

    vmem = pl.BlockSpec(memory_space=pltpu.MemorySpace.VMEM)
    out_tm = pl.pallas_call(
        lru_forward_kernel,
        out_shape=jax.ShapeDtypeStruct((T, B, D), jnp.float32),
        in_specs=[vmem] * 6,
        out_specs=vmem,
        scratch_shapes=[pltpu.VMEM((T * B, 2 * D), jnp.float32)],
        # NOTE: at larger B/T/D, add a grid over T ("arbitrary") with h_re/h_im
        # carried in VMEM scratch and set
        # pltpu.CompilerParams(vmem_limit_bytes=...) to size the scoped VMEM.
    )(x_tm, wi_cat, bi_cat, wo_cat, bo2, params_log)
    return jnp.transpose(out_tm, (1, 0, 2))                        # (B, T, D)


def lru_reference(x, wi, bi, wo, bo, params_log):
    """Pure-JAX f32 replica of the PyTorch forward (parallel doubling scan)."""
    B, T, D = x.shape
    u = x @ wi.T + bi
    params = jnp.exp(params_log)
    v, theta, gamma = params[0], params[1], params[2]
    uc = u.reshape(B, T, D, 2)
    uc = uc[..., 0] + 1j * uc[..., 1]
    log2_L = int(np.ceil(np.log2(T)))
    L = 2 ** log2_L
    uc = jnp.pad(uc, ((0, 0), (0, L - T), (0, 0)))
    xc = uc
    for i in range(1, log2_L + 1):
        l = 2 ** i
        xr = xc.reshape(B * L // l, l, D)
        x1, x2 = xr[:, :l // 2], xr[:, l // 2:]
        pos = jnp.arange(1, l // 2 + 1, dtype=jnp.float32)
        lambs = jnp.exp(pos[:, None] * (-v + 1j * theta)[None, :])
        x2 = x2 + lambs * x1[:, -1:]
        xc = jnp.concatenate([x1, x2], axis=1).reshape(B, L, D)
    xc = xc[:, :T] * gamma.astype(jnp.complex64)
    cat = jnp.concatenate([jnp.real(xc), jnp.imag(xc)], axis=-1)
    out = cat @ wo.T + bo
    return jax.nn.softmax(out, axis=0)


if __name__ == "__main__":
    B, T, D = 2, 8, 32   # batch=2, seq=8, in_features=32
    key = jax.random.PRNGKey(0)
    k_x, k_wi, k_bi, k_wo, k_bo, k_u1, k_u2 = jax.random.split(key, 7)

    x = jax.random.normal(k_x, (B, T, D), dtype=jnp.float32)

    # i_dense: Linear(D, 2D)  (PyTorch weight layout [out, in])
    bound_i = 1.0 / math.sqrt(D)
    wi = jax.random.uniform(k_wi, (2 * D, D), jnp.float32, -bound_i, bound_i)
    bi = jax.random.uniform(k_bi, (2 * D,), jnp.float32, -bound_i, bound_i)
    # o_dense: Linear(2D, D)
    bound_o = 1.0 / math.sqrt(2 * D)
    wo = jax.random.uniform(k_wo, (D, 2 * D), jnp.float32, -bound_o, bound_o)
    bo = jax.random.uniform(k_bo, (D,), jnp.float32, -bound_o, bound_o)

    # params_log, same construction as the module's __init__ (deterministic here)
    r_min, r_max = 0.9, 0.999
    u1 = jax.random.uniform(k_u1, (D,), jnp.float32)
    u2 = jax.random.uniform(k_u2, (D,), jnp.float32)
    v_log = jnp.log(-0.5 * jnp.log(u1 * (r_max ** 2 - r_min ** 2) + r_min ** 2))
    theta_log = jnp.log(u2 * jnp.pi * 2)
    gamma_log = jnp.log(jnp.sqrt(1.0 - jnp.exp(-jnp.exp(v_log)) ** 2))
    params_log = jnp.stack([v_log, theta_log, gamma_log], axis=0)  # [3, D]

    out = lru_forward(x, wi, bi, wo, bo, params_log)
    jax.block_until_ready(out)
    assert out.shape == (B, T, D) and out.dtype == jnp.float32

    ref = lru_reference(x, wi, bi, wo, bo, params_log)
    # Tolerance accounts for bf16 MXU operands (f32 accumulation) and the
    # EUP approximate reciprocal in the softmax.
    np.testing.assert_allclose(np.asarray(out), np.asarray(ref),
                               rtol=1e-2, atol=1e-2)
    print("KERNEL_OK")
</pallas_src>

<mosaic_0001>
module attributes {stable_mosaic.version = 11 : i64} {
  func.func @lru_forward_kernel(%arg0: memref<16x32xbf16, #tpu.memory_space<vmem>>, %arg1: memref<32x64xbf16, #tpu.memory_space<vmem>>, %arg2: memref<1x64xf32, #tpu.memory_space<vmem>>, %arg3: memref<64x32xbf16, #tpu.memory_space<vmem>>, %arg4: memref<1x32xf32, #tpu.memory_space<vmem>>, %arg5: memref<3x32xf32, #tpu.memory_space<vmem>>, %arg6: memref<8x2x32xf32, #tpu.memory_space<vmem>>, %arg7: memref<16x64xf32, #tpu.memory_space<vmem>>) attributes {dimension_semantics = [], scalar_prefetch = 0 : i64, scratch_operands = 1 : i64, tpu.core_type = #tpu.core_type<tc>} {
    %c0 = arith.constant 0 : index
    %c0_0 = arith.constant 0 : index
    %0 = vector.load %arg0[%c0, %c0_0] : memref<16x32xbf16, #tpu.memory_space<vmem>>, vector<16x32xbf16>
    %c0_1 = arith.constant 0 : index
    %c0_2 = arith.constant 0 : index
    %1 = vector.load %arg1[%c0_1, %c0_2] : memref<32x64xbf16, #tpu.memory_space<vmem>>, vector<32x64xbf16>
    %cst = arith.constant dense<0.000000e+00> : vector<16x64xf32>
    %2 = tpu.matmul %0, %1, %cst {dimension_numbers = #tpu.dot_dimension_numbers<[1], [0], [0], [1], [0, 0, 1, 1], [], []>} : vector<16x32xbf16>, vector<32x64xbf16>, vector<16x64xf32> -> vector<16x64xf32>
    %c0_3 = arith.constant 0 : index
    %c0_4 = arith.constant 0 : index
    %3 = vector.load %arg2[%c0_3, %c0_4] : memref<1x64xf32, #tpu.memory_space<vmem>>, vector<1x64xf32>
    %4 = vector.broadcast %3 : vector<1x64xf32> to vector<16x64xf32>
    %5 = arith.addf %2, %4 : vector<16x64xf32>
    %c0_5 = arith.constant 0 : index
    %c0_6 = arith.constant 0 : index
    %6 = vector.load %arg5[%c0_5, %c0_6] : memref<3x32xf32, #tpu.memory_space<vmem>>, vector<3x32xf32>
    %7 = vector.extract_strided_slice %6 {offsets = [0, 0], sizes = [1, 32], strides = [1, 1]} : vector<3x32xf32> to vector<1x32xf32>
    %8 = math.exp %7 : vector<1x32xf32>
    %9 = vector.extract_strided_slice %6 {offsets = [1, 0], sizes = [1, 32], strides = [1, 1]} : vector<3x32xf32> to vector<1x32xf32>
    %10 = math.exp %9 : vector<1x32xf32>
    %11 = vector.extract_strided_slice %6 {offsets = [2, 0], sizes = [1, 32], strides = [1, 1]} : vector<3x32xf32> to vector<1x32xf32>
    %12 = math.exp %11 : vector<1x32xf32>
    %cst_7 = arith.constant 0.000000e+00 : f32
    %13 = vector.broadcast %cst_7 : f32 to vector<1x32xf32>
    %14 = arith.subf %13, %8 : vector<1x32xf32>
    %15 = math.exp %14 : vector<1x32xf32>
    %16 = math.cos %10 : vector<1x32xf32>
    %17 = arith.mulf %15, %16 : vector<1x32xf32>
    %18 = vector.shape_cast %17 : vector<1x32xf32> to vector<1x32xf32>
    %19 = vector.broadcast %18 : vector<1x32xf32> to vector<2x32xf32>
    %20 = math.sin %10 : vector<1x32xf32>
    %21 = arith.mulf %15, %20 : vector<1x32xf32>
    %22 = vector.shape_cast %21 : vector<1x32xf32> to vector<1x32xf32>
    %23 = vector.broadcast %22 : vector<1x32xf32> to vector<2x32xf32>
    %24 = vector.shape_cast %12 : vector<1x32xf32> to vector<1x32xf32>
    %25 = vector.broadcast %24 : vector<1x32xf32> to vector<2x32xf32>
    %cst_8 = arith.constant 0.000000e+00 : f32
    %26 = vector.broadcast %cst_8 : f32 to vector<2x32xf32>
    %cst_9 = arith.constant 0.000000e+00 : f32
    %27 = vector.broadcast %cst_9 : f32 to vector<2x32xf32>
    %28 = vector.extract_strided_slice %5 {offsets = [0, 0], sizes = [2, 64], strides = [1, 1]} : vector<16x64xf32> to vector<2x64xf32>
    %29 = arith.mulf %19, %26 : vector<2x32xf32>
    %30 = arith.mulf %23, %27 : vector<2x32xf32>
    %31 = arith.subf %29, %30 : vector<2x32xf32>
    %32 = vector.extract_strided_slice %28 {offsets = [0, 0], sizes = [2, 32], strides = [1, 1]} : vector<2x64xf32> to vector<2x32xf32>
    %33 = arith.addf %31, %32 : vector<2x32xf32>
    %34 = arith.mulf %19, %27 : vector<2x32xf32>
    %35 = arith.mulf %23, %26 : vector<2x32xf32>
    %36 = arith.addf %34, %35 : vector<2x32xf32>
    %37 = vector.extract_strided_slice %28 {offsets = [0, 32], sizes = [2, 32], strides = [1, 1]} : vector<2x64xf32> to vector<2x32xf32>
    %38 = arith.addf %36, %37 : vector<2x32xf32>
    %39 = arith.mulf %25, %33 : vector<2x32xf32>
    %40 = arith.mulf %25, %38 : vector<2x32xf32>
    %41 = tpu.concatenate %39, %40 in 1 : vector<2x32xf32>, vector<2x32xf32> -> vector<2x64xf32>
    %c0_10 = arith.constant 0 : index
    %c0_11 = arith.constant 0 : index
    %42 = vector.load %arg7[%c0_10, %c0_11] : memref<16x64xf32, #tpu.memory_space<vmem>>, vector<2x64xf32>
    tpu.vector_store %arg7[%c0_10, %c0_11], %41 {strides = array<i32>} : memref<16x64xf32, #tpu.memory_space<vmem>>, vector<2x64xf32>,
    %43 = vector.extract_strided_slice %5 {offsets = [2, 0], sizes = [2, 64], strides = [1, 1]} : vector<16x64xf32> to vector<2x64xf32>
    %44 = arith.mulf %19, %33 : vector<2x32xf32>
    %45 = arith.mulf %23, %38 : vector<2x32xf32>
    %46 = arith.subf %44, %45 : vector<2x32xf32>
    %47 = vector.extract_strided_slice %43 {offsets = [0, 0], sizes = [2, 32], strides = [1, 1]} : vector<2x64xf32> to vector<2x32xf32>
    %48 = arith.addf %46, %47 : vector<2x32xf32>
    %49 = arith.mulf %19, %38 : vector<2x32xf32>
    %50 = arith.mulf %23, %33 : vector<2x32xf32>
    %51 = arith.addf %49, %50 : vector<2x32xf32>
    %52 = vector.extract_strided_slice %43 {offsets = [0, 32], sizes = [2, 32], strides = [1, 1]} : vector<2x64xf32> to vector<2x32xf32>
    %53 = arith.addf %51, %52 : vector<2x32xf32>
    %54 = arith.mulf %25, %48 : vector<2x32xf32>
    %55 = arith.mulf %25, %53 : vector<2x32xf32>
    %56 = tpu.concatenate %54, %55 in 1 : vector<2x32xf32>, vector<2x32xf32> -> vector<2x64xf32>
    %c2 = arith.constant 2 : index
    %c0_12 = arith.constant 0 : index
    %57 = vector.load %arg7[%c2, %c0_12] : memref<16x64xf32, #tpu.memory_space<vmem>>, vector<2x64xf32>
    tpu.vector_store %arg7[%c2, %c0_12], %56 {strides = array<i32>} : memref<16x64xf32, #tpu.memory_space<vmem>>, vector<2x64xf32>,
    %58 = vector.extract_strided_slice %5 {offsets = [4, 0], sizes = [2, 64], strides = [1, 1]} : vector<16x64xf32> to vector<2x64xf32>
    %59 = arith.mulf %19, %48 : vector<2x32xf32>
    %60 = arith.mulf %23, %53 : vector<2x32xf32>
    %61 = arith.subf %59, %60 : vector<2x32xf32>
    %62 = vector.extract_strided_slice %58 {offsets = [0, 0], sizes = [2, 32], strides = [1, 1]} : vector<2x64xf32> to vector<2x32xf32>
    %63 = arith.addf %61, %62 : vector<2x32xf32>
    %64 = arith.mulf %19, %53 : vector<2x32xf32>
    %65 = arith.mulf %23, %48 : vector<2x32xf32>
    %66 = arith.addf %64, %65 : vector<2x32xf32>
    %67 = vector.extract_strided_slice %58 {offsets = [0, 32], sizes = [2, 32], strides = [1, 1]} : vector<2x64xf32> to vector<2x32xf32>
    %68 = arith.addf %66, %67 : vector<2x32xf32>
    %69 = arith.mulf %25, %63 : vector<2x32xf32>
    %70 = arith.mulf %25, %68 : vector<2x32xf32>
    %71 = tpu.concatenate %69, %70 in 1 : vector<2x32xf32>, vector<2x32xf32> -> vector<2x64xf32>
    %c4 = arith.constant 4 : index
    %c0_13 = arith.constant 0 : index
    %72 = vector.load %arg7[%c4, %c0_13] : memref<16x64xf32, #tpu.memory_space<vmem>>, vector<2x64xf32>
    tpu.vector_store %arg7[%c4, %c0_13], %71 {strides = array<i32>} : memref<16x64xf32, #tpu.memory_space<vmem>>, vector<2x64xf32>,
    %73 = vector.extract_strided_slice %5 {offsets = [6, 0], sizes = [2, 64], strides = [1, 1]} : vector<16x64xf32> to vector<2x64xf32>
    %74 = arith.mulf %19, %63 : vector<2x32xf32>
    %75 = arith.mulf %23, %68 : vector<2x32xf32>
    %76 = arith.subf %74, %75 : vector<2x32xf32>
    %77 = vector.extract_strided_slice %73 {offsets = [0, 0], sizes = [2, 32], strides = [1, 1]} : vector<2x64xf32> to vector<2x32xf32>
    %78 = arith.addf %76, %77 : vector<2x32xf32>
    %79 = arith.mulf %19, %68 : vector<2x32xf32>
    %80 = arith.mulf %23, %63 : vector<2x32xf32>
    %81 = arith.addf %79, %80 : vector<2x32xf32>
    %82 = vector.extract_strided_slice %73 {offsets = [0, 32], sizes = [2, 32], strides = [1, 1]} : vector<2x64xf32> to vector<2x32xf32>
    %83 = arith.addf %81, %82 : vector<2x32xf32>
    %84 = arith.mulf %25, %78 : vector<2x32xf32>
    %85 = arith.mulf %25, %83 : vector<2x32xf32>
    %86 = tpu.concatenate %84, %85 in 1 : vector<2x32xf32>, vector<2x32xf32> -> vector<2x64xf32>
    %c6 = arith.constant 6 : index
    %c0_14 = arith.constant 0 : index
    %87 = vector.load %arg7[%c6, %c0_14] : memref<16x64xf32, #tpu.memory_space<vmem>>, vector<2x64xf32>
    tpu.vector_store %arg7[%c6, %c0_14], %86 {strides = array<i32>} : memref<16x64xf32, #tpu.memory_space<vmem>>, vector<2x64xf32>,
    %88 = vector.extract_strided_slice %5 {offsets = [8, 0], sizes = [2, 64], strides = [1, 1]} : vector<16x64xf32> to vector<2x64xf32>
    %89 = arith.mulf %19, %78 : vector<2x32xf32>
    %90 = arith.mulf %23, %83 : vector<2x32xf32>
    %91 = arith.subf %89, %90 : vector<2x32xf32>
    %92 = vector.extract_strided_slice %88 {offsets = [0, 0], sizes = [2, 32], strides = [1, 1]} : vector<2x64xf32> to vector<2x32xf32>
    %93 = arith.addf %91, %92 : vector<2x32xf32>
    %94 = arith.mulf %19, %83 : vector<2x32xf32>
    %95 = arith.mulf %23, %78 : vector<2x32xf32>
    %96 = arith.addf %94, %95 : vector<2x32xf32>
    %97 = vector.extract_strided_slice %88 {offsets = [0, 32], sizes = [2, 32], strides = [1, 1]} : vector<2x64xf32> to vector<2x32xf32>
    %98 = arith.addf %96, %97 : vector<2x32xf32>
    %99 = arith.mulf %25, %93 : vector<2x32xf32>
    %100 = arith.mulf %25, %98 : vector<2x32xf32>
    %101 = tpu.concatenate %99, %100 in 1 : vector<2x32xf32>, vector<2x32xf32> -> vector<2x64xf32>
    %c8 = arith.constant 8 : index
    %c0_15 = arith.constant 0 : index
    %102 = vector.load %arg7[%c8, %c0_15] : memref<16x64xf32, #tpu.memory_space<vmem>>, vector<2x64xf32>
    tpu.vector_store %arg7[%c8, %c0_15], %101 {strides = array<i32>} : memref<16x64xf32, #tpu.memory_space<vmem>>, vector<2x64xf32>,
    %103 = vector.extract_strided_slice %5 {offsets = [10, 0], sizes = [2, 64], strides = [1, 1]} : vector<16x64xf32> to vector<2x64xf32>
    %104 = arith.mulf %19, %93 : vector<2x32xf32>
    %105 = arith.mulf %23, %98 : vector<2x32xf32>
    %106 = arith.subf %104, %105 : vector<2x32xf32>
    %107 = vector.extract_strided_slice %103 {offsets = [0, 0], sizes = [2, 32], strides = [1, 1]} : vector<2x64xf32> to vector<2x32xf32>
    %108 = arith.addf %106, %107 : vector<2x32xf32>
    %109 = arith.mulf %19, %98 : vector<2x32xf32>
    %110 = arith.mulf %23, %93 : vector<2x32xf32>
    %111 = arith.addf %109, %110 : vector<2x32xf32>
    %112 = vector.extract_strided_slice %103 {offsets = [0, 32], sizes = [2, 32], strides = [1, 1]} : vector<2x64xf32> to vector<2x32xf32>
    %113 = arith.addf %111, %112 : vector<2x32xf32>
    %114 = arith.mulf %25, %108 : vector<2x32xf32>
    %115 = arith.mulf %25, %113 : vector<2x32xf32>
    %116 = tpu.concatenate %114, %115 in 1 : vector<2x32xf32>, vector<2x32xf32> -> vector<2x64xf32>
    %c10 = arith.constant 10 : index
    %c0_16 = arith.constant 0 : index
    %117 = vector.load %arg7[%c10, %c0_16] : memref<16x64xf32, #tpu.memory_space<vmem>>, vector<2x64xf32>
    tpu.vector_store %arg7[%c10, %c0_16], %116 {strides = array<i32>} : memref<16x64xf32, #tpu.memory_space<vmem>>, vector<2x64xf32>,
    %118 = vector.extract_strided_slice %5 {offsets = [12, 0], sizes = [2, 64], strides = [1, 1]} : vector<16x64xf32> to vector<2x64xf32>
    %119 = arith.mulf %19, %108 : vector<2x32xf32>
    %120 = arith.mulf %23, %113 : vector<2x32xf32>
    %121 = arith.subf %119, %120 : vector<2x32xf32>
    %122 = vector.extract_strided_slice %118 {offsets = [0, 0], sizes = [2, 32], strides = [1, 1]} : vector<2x64xf32> to vector<2x32xf32>
    %123 = arith.addf %121, %122 : vector<2x32xf32>
    %124 = arith.mulf %19, %113 : vector<2x32xf32>
    %125 = arith.mulf %23, %108 : vector<2x32xf32>
    %126 = arith.addf %124, %125 : vector<2x32xf32>
    %127 = vector.extract_strided_slice %118 {offsets = [0, 32], sizes = [2, 32], strides = [1, 1]} : vector<2x64xf32> to vector<2x32xf32>
    %128 = arith.addf %126, %127 : vector<2x32xf32>
    %129 = arith.mulf %25, %123 : vector<2x32xf32>
    %130 = arith.mulf %25, %128 : vector<2x32xf32>
    %131 = tpu.concatenate %129, %130 in 1 : vector<2x32xf32>, vector<2x32xf32> -> vector<2x64xf32>
    %c12 = arith.constant 12 : index
    %c0_17 = arith.constant 0 : index
    %132 = vector.load %arg7[%c12, %c0_17] : memref<16x64xf32, #tpu.memory_space<vmem>>, vector<2x64xf32>
    tpu.vector_store %arg7[%c12, %c0_17], %131 {strides = array<i32>} : memref<16x64xf32, #tpu.memory_space<vmem>>, vector<2x64xf32>,
    %133 = vector.extract_strided_slice %5 {offsets = [14, 0], sizes = [2, 64], strides = [1, 1]} : vector<16x64xf32> to vector<2x64xf32>
    %134 = arith.mulf %19, %123 : vector<2x32xf32>
    %135 = arith.mulf %23, %128 : vector<2x32xf32>
    %136 = arith.subf %134, %135 : vector<2x32xf32>
    %137 = vector.extract_strided_slice %133 {offsets = [0, 0], sizes = [2, 32], strides = [1, 1]} : vector<2x64xf32> to vector<2x32xf32>
    %138 = arith.addf %136, %137 : vector<2x32xf32>
    %139 = arith.mulf %19, %128 : vector<2x32xf32>
    %140 = arith.mulf %23, %123 : vector<2x32xf32>
    %141 = arith.addf %139, %140 : vector<2x32xf32>
    %142 = vector.extract_strided_slice %133 {offsets = [0, 32], sizes = [2, 32], strides = [1, 1]} : vector<2x64xf32> to vector<2x32xf32>
    %143 = arith.addf %141, %142 : vector<2x32xf32>
    %144 = arith.mulf %25, %138 : vector<2x32xf32>
    %145 = arith.mulf %25, %143 : vector<2x32xf32>
    %146 = tpu.concatenate %144, %145 in 1 : vector<2x32xf32>, vector<2x32xf32> -> vector<2x64xf32>
    %c14 = arith.constant 14 : index
    %c0_18 = arith.constant 0 : index
    %147 = vector.load %arg7[%c14, %c0_18] : memref<16x64xf32, #tpu.memory_space<vmem>>, vector<2x64xf32>
    tpu.vector_store %arg7[%c14, %c0_18], %146 {strides = array<i32>} : memref<16x64xf32, #tpu.memory_space<vmem>>, vector<2x64xf32>,
    %c0_19 = arith.constant 0 : index
    %c0_20 = arith.constant 0 : index
    %148 = vector.load %arg7[%c0_19, %c0_20] : memref<16x64xf32, #tpu.memory_space<vmem>>, vector<16x64xf32>
    %149 = arith.truncf %148 : vector<16x64xf32> to vector<16x64xbf16>
    %c0_21 = arith.constant 0 : index
    %c0_22 = arith.constant 0 : index
    %150 = vector.load %arg3[%c0_21, %c0_22] : memref<64x32xbf16, #tpu.memory_space<vmem>>, vector<64x32xbf16>
    %cst_23 = arith.constant dense<0.000000e+00> : vector<16x32xf32>
    %151 = tpu.matmul %149, %150, %cst_23 {dimension_numbers = #tpu.dot_dimension_numbers<[1], [0], [0], [1], [0, 0, 1, 1], [], []>} : vector<16x64xbf16>, vector<64x32xbf16>, vector<16x32xf32> -> vector<16x32xf32>
    %c0_24 = arith.constant 0 : index
    %c0_25 = arith.constant 0 : index
    %152 = vector.load %arg4[%c0_24, %c0_25] : memref<1x32xf32, #tpu.memory_space<vmem>>, vector<1x32xf32>
    %153 = vector.broadcast %152 : vector<1x32xf32> to vector<16x32xf32>
    %154 = arith.addf %151, %153 : vector<16x32xf32>
    %155 = vector.shape_cast %154 : vector<16x32xf32> to vector<8x2x32xf32>
    %cst_26 = arith.constant dense<0xFF800000> : vector<8x32xf32>
    %156 = vector.multi_reduction <maximumf>, %155, %cst_26 [1] : vector<8x2x32xf32> to vector<8x32xf32>
    %157 = vector.shape_cast %156 : vector<8x32xf32> to vector<8x1x32xf32>
    %158 = vector.broadcast %157 : vector<8x1x32xf32> to vector<8x2x32xf32>
    %159 = arith.subf %155, %158 : vector<8x2x32xf32>
    %160 = math.exp %159 : vector<8x2x32xf32>
    %cst_27 = arith.constant dense<0.000000e+00> : vector<8x32xf32>
    %161 = vector.multi_reduction <add>, %160, %cst_27 [1] : vector<8x2x32xf32> to vector<8x32xf32>
    %162 = vector.shape_cast %161 : vector<8x32xf32> to vector<8x1x32xf32>
    %163 = tpu.reciprocal %162 {approx = true} : vector<8x1x32xf32> -> vector<8x1x32xf32>
    %164 = vector.broadcast %163 : vector<8x1x32xf32> to vector<8x2x32xf32>
    %165 = arith.mulf %160, %164 : vector<8x2x32xf32>
    %c0_28 = arith.constant 0 : index
    %c0_29 = arith.constant 0 : index
    %c0_30 = arith.constant 0 : index
    %166 = vector.load %arg6[%c0_28, %c0_29, %c0_30] : memref<8x2x32xf32, #tpu.memory_space<vmem>>, vector<8x2x32xf32>
    tpu.vector_store %arg6[%c0_28, %c0_29, %c0_30], %165 {strides = array<i32>} : memref<8x2x32xf32, #tpu.memory_space<vmem>>, vector<8x2x32xf32>,
    return
  }
}

</mosaic_0001>

<llo_original>
// kernel: tpu_custom_call.1
$region0: #{tpu_custom_call.1}
  #allocation0 [shape = 'u32[]', space=smem, size = 0x4, offset = 0x4, fixed_abs, tag = 'smem constant byte address 0x4 - core index']
  #allocation1 [shape = 'u32[144,128]{1,0:T(1,128)}', space=vmem, size = 0x12000, scoped, tag = 'internal scratch']
  #allocation2 [shape = 'f32[16,64]{1,0:T(8,128)}', space=vmem, size = 0x2000, scoped, tag = 'scratch operand']
  %s0 = inlined_call_operand.vmem [shape: bf16[16,32], index: 0, kind: input, shape index: {}]
  %s1 = inlined_call_operand.vmem [shape: bf16[32,64], index: 1, kind: input, shape index: {}]
  %s2 = inlined_call_operand.vmem [shape: f32[1,64], index: 2, kind: input, shape index: {}]
  %s3 = inlined_call_operand.vmem [shape: bf16[64,32], index: 3, kind: input, shape index: {}]
  %s4 = inlined_call_operand.vmem [shape: f32[1,32], index: 4, kind: input, shape index: {}]
  %s5 = inlined_call_operand.vmem [shape: f32[3,32], index: 5, kind: input, shape index: {}]
  %s6 = inlined_call_operand.hbm [shape: f32[8,2,32], index: 6, kind: output, shape index: {}]
  %s7 = sld [smem:[#allocation0]]
  $region34: #{tpu_custom_call.1} parent=0
    _
  %s9 = ssub.s32 1, %s7
  %s10 = scalar_select 0, %s9, %s7
  $region1: #{tpu_custom_call.1} parent=0
    #allocation3 [shape = 'u8[8192]{0}', space=vmem, size = 0x2000, scoped, tag = 'output window, operand 0, single buffered']
    #allocation4 [shape = 's32[1]{0}', space=sflag, size = 0x4, scoped, tag = 'scoped memory for tpu_custom_call.1']
    %11 = vsyncpa [#allocation4], 0
    // Predicated region
    $region2: #{tpu_custom_call.1} parent=1 // pred_check
      _
    $region3: #{tpu_custom_call.1} parent=1 // pred_check_branch
      %13 = sbr.rel (0) target = $region5
    $region4: #{tpu_custom_call.1} parent=1 // pred_region
      _
    $region5: #{tpu_custom_call.1} parent=1 // pred_fallthru
      _
    // Predicated region
    $region6: #{tpu_custom_call.1} parent=1 // pred_check
      _
    $region7: #{tpu_custom_call.1} parent=1 // pred_check_branch
      %15 = sbr.rel (0) target = $region9
    $region8: #{tpu_custom_call.1} parent=1 // pred_region
      _
    $region9: #{tpu_custom_call.1} parent=1 // pred_fallthru
      _
    // Predicated region
    $region10: #{tpu_custom_call.1} parent=1 // pred_check
      _
    $region11: #{tpu_custom_call.1} parent=1 // pred_check_branch
      %17 = sbr.rel (0) target = $region13
    $region12: #{tpu_custom_call.1} parent=1 // pred_region
      _
    $region13: #{tpu_custom_call.1} parent=1 // pred_fallthru
      _
    // Predicated region
    $region14: #{tpu_custom_call.1} parent=1 // pred_check
      _
    $region15: #{tpu_custom_call.1} parent=1 // pred_check_branch
      %19 = sbr.rel (0) target = $region17
    $region16: #{tpu_custom_call.1} parent=1 // pred_region
      _
    $region17: #{tpu_custom_call.1} parent=1 // pred_fallthru
      _
    // Predicated region
    $region18: #{tpu_custom_call.1} parent=1 // pred_check
      _
    $region19: #{tpu_custom_call.1} parent=1 // pred_check_branch
      %21 = sbr.rel (0) target = $region21
    $region20: #{tpu_custom_call.1} parent=1 // pred_region
      _
    $region21: #{tpu_custom_call.1} parent=1 // pred_fallthru
      _
    // Predicated region
    $region22: #{tpu_custom_call.1} parent=1 // pred_check
      _
    $region23: #{tpu_custom_call.1} parent=1 // pred_check_branch
      %23 = sbr.rel (0) target = $region25
    $region24: #{tpu_custom_call.1} parent=1 // pred_region
      _
    $region25: #{tpu_custom_call.1} parent=1 // pred_fallthru
      _
    %v25 = vld [vmem:[%s0] sm:$0xf]
    %v26 = vld [vmem:[%s0 + $0x4] sm:$0xf]
    %v27 = vld [vmem:[%s1] sm:$0xf]
    %v28 = vld [vmem:[%s1 + $0x4] sm:$0xf]
    %v29 = vld [vmem:[%s1 + $0x8] sm:$0xf]
    %v30 = vld [vmem:[%s1 + $0xc] sm:$0xf]
    %v31 = vld [vmem:[%s2] sm:$0x1]
    %v33 = vlaneseq
    %v34 = vshrl.u32 %v33, 7
    %v35 = vsub.s32 0, %v34
    %v36 = vrot.slane %v31, %v35
    %v40 = vunpack.c.l.b16 %v25
    %v41 = vunpack.c.l.b16 %v26
    %v42 = vpack.c.b16 %v41, %v40
    %v47 = vunpack.c.l.b16 %v27
    %v48 = vunpack.c.l.b16 %v28
    %v49 = vunpack.c.l.b16 %v29
    %v50 = vunpack.c.l.b16 %v30
    %v51 = vpack.c.b16 %v48, %v47
    %v52 = vpack.c.b16 %v50, %v49
    %vm55 = vcmask 261120
    %v57 = vsel %vm55, %v42, 0
    %59 = vmatprep.subr.bf16.mxu0 0
    %60 = vmatpush1.bf16.msra.mxu0 0
    %61 = vmatprep.subr.bf16.mxu0 0
    %62 = vmatpush1.bf16.msra.mxu0 0
    %63 = vmatprep.subr.bf16.mxu0 0
    %64 = vmatpush1.bf16.msra.mxu0 0
    %65 = vmatprep.subr.bf16.mxu0 0
    %66 = vmatpush1.bf16.msra.mxu0 0
    %67 = vmatprep.subr.bf16.mxu0 0
    %68 = vmatpush1.bf16.msra.mxu0 0
    %69 = vmatprep.subr.bf16.mxu0 0
    %70 = vmatpush1.bf16.msra.mxu0 0
    %71 = vmatprep.subr.bf16.mxu0 0
    %72 = vmatpush1.bf16.msra.mxu0 %v52
    %73 = vmatprep.subr.bf16.mxu0 0
    %74 = vmatpush1.bf16.msra.mxu0 %v51
    %75 = vmatprep.subr.bf16.mxu0 0
    %76 = vmatpush2.bf16.msra.mxu0 0
    %77 = vmatprep.subr.bf16.mxu0 0
    %78 = vmatpush2.bf16.msra.mxu0 0
    %79 = vmatprep.subr.bf16.mxu0 0
    %80 = vmatpush2.bf16.msra.mxu0 0
    %81 = vmatprep.subr.bf16.mxu0 0
    %82 = vmatpush2.bf16.msra.mxu0 0
    %83 = vmatprep.subr.bf16.mxu0 0
    %84 = vmatpush2.bf16.msra.mxu0 0
    %85 = vmatprep.subr.bf16.mxu0 0
    %86 = vmatpush2.bf16.msra.mxu0 0
    %87 = vmatprep.subr.bf16.mxu0 0
    %88 = vmatpush2.bf16.msra.mxu0 0
    %89 = vmatprep.subr.bf16.mxu0 0
    %90 = vmatpush2.bf16.msra.mxu0 0
    %91 = vmatprep.mubr.bf16.mxu0 0
    %92 = vmatmul.mubr.bf16.gmra.mxu0 %v57
    %v93 = vpop.f32.mrf.mxu0
    %v94 = vadd.f32 %v36, %v93
    %v95 = vpop.f32.mrf.mxu0
    %v96 = vpop.f32.mrf.mxu0
    %v97 = vadd.f32 %v36, %v96
    %v98 = vpop.f32.mrf.mxu0
    %99 = vdwg.mxu0
    %v100 = vld [vmem:[%s5] sm:$0x7]
    %v101 = vmul.f32 %v100, 1.442695
    %v102 = vpow.pop %v101
    %v103 = vsub.f32 0.0, %v102
    %v104 = vmul.f32 %v103, 1.442695
    %v105 = vpow.pop %v104
    %v106 = vand.u32 2147483647, %v102
    %vm107 = vcmp.le.f32.partialorder %v106, 0.7853982
    %vm108 = vcmp.lt.s32.totalorder %v102, 0
    %v109 = vand.u32 %v102, 2139095040
    %v110 = vshrl.u32 %v109, 23
    %v111 = vsub.s32 %v110, 127
    %v112 = vand.u32 2147483647, %v102
    %v113 = vand.u32 %v112, 8388607
    %v114 = vor.u32 %v113, 8388608
    %v115 = vsub.s32 0, %v114
    %v116 = vadd.s32 %v111, 1
    %vm117 = vcmp.gt.s32.totalorder %v116, 0
    %v118 = vsel %vm117, %v116, 0
    %v119 = vshrl.u32 %v118, 5
    %v120 = vand.u32 %v118, 31
    %v121 = vsub.s32 32, %v120
    %v122 = vshrl.u32 683565275, %v121
    %v123 = vshll.u32 683565275, %v120
    %v124 = vshrl.u32 2475754826, %v121
    %v125 = vor.u32 %v123, %v124
    %v126 = vshll.u32 2475754826, %v120
    %v127 = vshrl.u32 2131351028, %v121
    %v128 = vor.u32 %v126, %v127
    %v129 = vshll.u32 2131351028, %v120
    %v130 = vshrl.u32 2102212464, %v121
    %v131 = vor.u32 %v129, %v130
    %v132 = vshll.u32 2102212464, %v120
    %v133 = vshrl.u32 920167782, %v121
    %v134 = vor.u32 %v132, %v133
    %v135 = vshll.u32 920167782, %v120
    %v136 = vshrl.u32 1326507024, %v121
    %v137 = vor.u32 %v135, %v136
    %vm138 = vcmp.lt.s32.totalorder %v119, 1
    %vm139 = vcmp.lt.s32.totalorder %v119, 2
    %vm140 = vcmp.lt.s32.totalorder %v119, 3
    %vm141 = vcmp.lt.s32.totalorder %v119, 4
    %v142 = vsel %vm138, %v122, %v125
    %v143 = vsel %vm141, %v131, 2102212464
    %v144 = vsel %vm140, %v128, %v143
    %v145 = vsel %vm139, %v142, %v144
    %v146 = vsel %vm138, %v125, %v128
    %v147 = vsel %vm141, %v134, 920167782
    %v148 = vsel %vm140, %v131, %v147
    %v149 = vsel %vm139, %v146, %v148
    %v150 = vsel %vm138, %v128, %v131
    %v151 = vsel %vm141, %v137, 1326507024
    %v152 = vsel %vm140, %v134, %v151
    %v153 = vsel %vm139, %v150, %v152
    %v154 = vshll.u32 %v114, 8
    %v155 = vmul.u32.u64.compose %v154, %v153
    %v156 = vextract.low.u32 %v155
    %v157 = vextract.high.u32 %v155
    %v158 = vmul.u32.u64.compose %v154, %v149
    %v159 = vextract.low.u32 %v158
    %v160 = vextract.high.u32 %v158
    %v161 = vmul.u32 %v154, %v145
    %v162 = vadd.s32 %v157, %v159
    %vm163 = vc.u32 %v157, %v159
    %v164 = vadd.s32 %v160, 1
    %v165 = vsel %vm163, %v164, %v160
    %v166 = vadd.s32 %v161, %v165
    %v167 = vadd.s32 %v166, 536870912
    %v168 = vshrl.u32 %v167, 30
    %v169 = vshll.u32 %v168, 30
    %v170 = vsub.s32 %v166, %v169
    %vm171 = vcmp.lt.s32.totalorder %v170, 0
    %v172 = vsub.s32 0, %v170
    %v173 = vsel %vm171, %v172, %v170
    %v174 = vclz %v173
    %v175 = vsub.s32 %v174, 2
    %vm176 = vcmp.gt.s32.totalorder 0, %v175
    %v177 = vsel %vm176, 0, %v175
    %v178 = vsub.s32 32, %v177
    %v179 = vshll.u32 %v170, %v177
    %v180 = vshrl.u32 %v162, %v178
    %v181 = vor.u32 %v179, %v180
    %v182 = vsub.s32 4294967266, %v177
    %v183 = vadd.s32 %v182, 127
    %v184 = vshll.u32 %v183, 23
    %v185 = vor.u32 4788187, %v184
    %v186 = vand.u32 2147483647, %v185
    %v188 = vcvt.s32.f32 %v181
    %v189 = vmul.f32 %v188, %v186
    %v190 = vxor.u32 %v189, 2147483648
    %v191 = vsel %vm108, %v190, %v189
    %v192 = vsub.s32 4, %v168
    %v193 = vsel %vm108, %v192, %v168
    %v194 = vsel %vm107, %v102, %v191
    %v195 = vsel %vm107, 0, %v193
    %v196 = vcosq.f32.pop %v194
    %v197 = vsinq.f32.pop %v194
    %vm198 = vweird.f32 %v102
    %v199 = vand.u32 %v195, 3
    %vm200 = vcmp.lt.s32.totalorder %v199, 2
    %vm201 = vcmp.eq.s32.totalorder %v199, 0
    %v202 = vxor.u32 %v197, 2147483648
    %v203 = vsel %vm201, %v196, %v202
    %vm204 = vcmp.eq.s32.totalorder %v199, 2
    %v205 = vxor.u32 %v196, 2147483648
    %v206 = vsel %vm204, %v205, %v197
    %v207 = vsel %vm200, %v203, %v206
    %v208 = vsel %vm198, nan, %v207
    %v210 = vrot.slane %v208, 1
    %v212 = vmul.f32 %v105, %v210
    %v213 = vlaneseq
    %v214 = vshrl.u32 %v213, 7
    %v215 = vsub.s32 0, %v214
    %v216 = vrot.slane %v212, %v215
    %v217 = vand.u32 2147483647, %v102
    %vm218 = vcmp.le.f32.partialorder %v217, 0.7853982
    %vm219 = vcmp.lt.s32.totalorder %v102, 0
    %v220 = vand.u32 %v102, 2139095040
    %v221 = vshrl.u32 %v220, 23
    %v222 = vsub.s32 %v221, 127
    %v223 = vand.u32 2147483647, %v102
    %v224 = vand.u32 %v223, 8388607
    %v225 = vor.u32 %v224, 8388608
    %v226 = vsub.s32 0, %v225
    %v227 = vadd.s32 %v222, 1
    %vm228 = vcmp.gt.s32.totalorder %v227, 0
    %v229 = vsel %vm228, %v227, 0
    %v230 = vshrl.u32 %v229, 5
    %v231 = vand.u32 %v229, 31
    %v232 = vsub.s32 32, %v231
    %v233 = vshrl.u32 683565275, %v232
    %v234 = vshll.u32 683565275, %v231
    %v235 = vshrl.u32 2475754826, %v232
    %v236 = vor.u32 %v234, %v235
    %v237 = vshll.u32 2475754826, %v231
    %v238 = vshrl.u32 2131351028, %v232
    %v239 = vor.u32 %v237, %v238
    %v240 = vshll.u32 2131351028, %v231
    %v241 = vshrl.u32 2102212464, %v232
    %v242 = vor.u32 %v240, %v241
    %v243 = vshll.u32 2102212464, %v231
    %v244 = vshrl.u32 920167782, %v232
    %v245 = vor.u32 %v243, %v244
    %v246 = vshll.u32 920167782, %v231
    %v247 = vshrl.u32 1326507024, %v232
    %v248 = vor.u32 %v246, %v247
    %vm249 = vcmp.lt.s32.totalorder %v230, 1
    %vm250 = vcmp.lt.s32.totalorder %v230, 2
    %vm251 = vcmp.lt.s32.totalorder %v230, 3
    %vm252 = vcmp.lt.s32.totalorder %v230, 4
    %v253 = vsel %vm249, %v233, %v236
    %v254 = vsel %vm252, %v242, 2102212464
    %v255 = vsel %vm251, %v239, %v254
    %v256 = vsel %vm250, %v253, %v255
    %v257 = vsel %vm249, %v236, %v239
    %v258 = vsel %vm252, %v245, 920167782
    %v259 = vsel %vm251, %v242, %v258
    %v260 = vsel %vm250, %v257, %v259
    %v261 = vsel %vm249, %v239, %v242
    %v262 = vsel %vm252, %v248, 1326507024
    %v263 = vsel %vm251, %v245, %v262
    %v264 = vsel %vm250, %v261, %v263
    %v265 = vshll.u32 %v225, 8
    %v266 = vmul.u32.u64.compose %v265, %v264
    %v267 = vextract.low.u32 %v266
    %v268 = vextract.high.u32 %v266
    %v269 = vmul.u32.u64.compose %v265, %v260
    %v270 = vextract.low.u32 %v269
    %v271 = vextract.high.u32 %v269
    %v272 = vmul.u32 %v265, %v256
    %v273 = vadd.s32 %v268, %v270
    %vm274 = vc.u32 %v268, %v270
    %v275 = vadd.s32 %v271, 1
    %v276 = vsel %vm274, %v275, %v271
    %v277 = vadd.s32 %v272, %v276
    %v278 = vadd.s32 %v277, 536870912
    %v279 = vshrl.u32 %v278, 30
    %v280 = vshll.u32 %v279, 30
    %v281 = vsub.s32 %v277, %v280
    %vm282 = vcmp.lt.s32.totalorder %v281, 0
    %v283 = vsub.s32 0, %v281
    %v284 = vsel %vm282, %v283, %v281
    %v285 = vclz %v284
    %v286 = vsub.s32 %v285, 2
    %vm287 = vcmp.gt.s32.totalorder 0, %v286
    %v288 = vsel %vm287, 0, %v286
    %v289 = vsub.s32 32, %v288
    %v290 = vshll.u32 %v281, %v288
    %v291 = vshrl.u32 %v273, %v289
    %v292 = vor.u32 %v290, %v291
    %v293 = vsub.s32 4294967266, %v288
    %v294 = vadd.s32 %v293, 127
    %v295 = vshll.u32 %v294, 23
    %v296 = vor.u32 4788187, %v295
    %v297 = vand.u32 2147483647, %v296
    %v299 = vcvt.s32.f32 %v292
    %v300 = vmul.f32 %v299, %v297
    %v301 = vxor.u32 %v300, 2147483648
    %v302 = vsel %vm219, %v301, %v300
    %v303 = vsub.s32 4, %v279
    %v304 = vsel %vm219, %v303, %v279
    %v305 = vsel %vm218, %v102, %v302
    %v306 = vsel %vm218, 0, %v304
    %v307 = vcosq.f32.pop %v305
    %v308 = vsinq.f32.pop %v305
    %vm309 = vweird.f32 %v102
    %v310 = vadd.s32 %v306, 3
    %v311 = vand.u32 %v310, 3
    %vm312 = vcmp.lt.s32.totalorder %v311, 2
    %vm313 = vcmp.eq.s32.totalorder %v311, 0
    %v314 = vxor.u32 %v308, 2147483648
    %v315 = vsel %vm313, %v307, %v314
    %vm316 = vcmp.eq.s32.totalorder %v311, 2
    %v317 = vxor.u32 %v307, 2147483648
    %v318 = vsel %vm316, %v317, %v308
    %v319 = vsel %vm312, %v315, %v318
    %v320 = vsel %vm309, nan, %v319
    %v322 = vrot.slane %v320, 1
    %v324 = vmul.f32 %v105, %v322
    %v325 = vlaneseq
    %v326 = vshrl.u32 %v325, 7
    %v327 = vsub.s32 0, %v326
    %v328 = vrot.slane %v324, %v327
    %v329 = vlaneseq
    %v330 = vshrl.u32 %v329, 7
    %v331 = vsub.s32 2, %v330
    %v332 = vrot.slane %v102, %v331
    %v333 = vmul.f32 %v216, 0.0
    %v334 = vmul.f32 %v328, 0.0
    %v335 = vsub.f32 %v333, %v334
    %v336 = vadd.f32 %v335, %v94
    %v337 = vadd.f32 %v333, %v334
    %339 = vrot.lane.b32.xlu0 %v94, 96
    %v340 = vpop.permute.xlu0 %339
    %v342 = vadd.f32 %v337, %v340
    %v343 = vmul.f32 %v332, %v336
    %v344 = vmul.f32 %v332, %v342
    %346 = vrot.lane.b32.xlu0 %v344, 32
    %v347 = vpop.permute.xlu0 %346
    %v349 = vsel %vm55, %v343, %v347
    %vm350 = vcmask 517120
    %351 = vst.msk [vmem:[#allocation2] sm:$0x3] %vm350, %v349
    %v352 = vmul.f32 %v216, %v336
    %v353 = vmul.f32 %v328, %v342
    %v354 = vsub.f32 %v352, %v353
    %v355 = vrot.slane %v94, 2
    %v357 = vadd.f32 %v354, %v355
    %v358 = vmul.f32 %v216, %v342
    %v359 = vmul.f32 %v328, %v336
    %v360 = vadd.f32 %v358, %v359
    %361 = vrot.lane.b32.xlu0 %v355, 96
    %v362 = vpop.permute.xlu0 %361
    %v364 = vadd.f32 %v360, %v362
    %v365 = vmul.f32 %v332, %v357
    %v366 = vmul.f32 %v332, %v364
    %368 = vrot.lane.b32.xlu0 %v366, 32
    %v369 = vpop.permute.xlu0 %368
    %v371 = vsel %vm55, %v365, %v369
    %372 = vst.msk [vmem:[#allocation2 + $0x2] sm:$0x3] %vm350, %v371
    %v373 = vmul.f32 %v216, %v357
    %v374 = vmul.f32 %v328, %v364
    %v375 = vsub.f32 %v373, %v374
    %v376 = vrot.slane %v94, 4
    %v378 = vadd.f32 %v375, %v376
    %v379 = vmul.f32 %v216, %v364
    %v380 = vmul.f32 %v328, %v357
    %v381 = vadd.f32 %v379, %v380
    %382 = vrot.lane.b32.xlu0 %v376, 96
    %v383 = vpop.permute.xlu0 %382
    %v385 = vadd.f32 %v381, %v383
    %v386 = vmul.f32 %v332, %v378
    %v387 = vmul.f32 %v332, %v385
    %389 = vrot.lane.b32.xlu0 %v387, 32
    %v390 = vpop.permute.xlu0 %389
    %v392 = vsel %vm55, %v386, %v390
    %393 = vst.msk [vmem:[#allocation2 + $0x4] sm:$0x3] %vm350, %v392
    %v394 = vmul.f32 %v216, %v378
    %v395 = vmul.f32 %v328, %v385
    %v396 = vsub.f32 %v394, %v395
    %v397 = vrot.slane %v94, 6
    %v399 = vadd.f32 %v396, %v397
    %v400 = vmul.f32 %v216, %v385
    %v401 = vmul.f32 %v328, %v378
    %v402 = vadd.f32 %v400, %v401
    %403 = vrot.lane.b32.xlu0 %v397, 96
    %v404 = vpop.permute.xlu0 %403
    %v406 = vadd.f32 %v402, %v404
    %v407 = vmul.f32 %v332, %v399
    %v408 = vmul.f32 %v332, %v406
    %410 = vrot.lane.b32.xlu0 %v408, 32
    %v411 = vpop.permute.xlu0 %410
    %v413 = vsel %vm55, %v407, %v411
    %414 = vst.msk [vmem:[#allocation2 + $0x6] sm:$0x3] %vm350, %v413
    %v415 = vmul.f32 %v216, %v399
    %v416 = vmul.f32 %v328, %v406
    %v417 = vsub.f32 %v415, %v416
    %v418 = vadd.f32 %v417, %v97
    %v419 = vmul.f32 %v216, %v406
    %v420 = vmul.f32 %v328, %v399
    %v421 = vadd.f32 %v419, %v420
    %423 = vrot.lane.b32.xlu0 %v97, 96
    %v424 = vpop.permute.xlu0 %423
    %v426 = vadd.f32 %v421, %v424
    %v427 = vmul.f32 %v332, %v418
    %v428 = vmul.f32 %v332, %v426
    %430 = vrot.lane.b32.xlu0 %v428, 32
    %v431 = vpop.permute.xlu0 %430
    %v433 = vsel %vm55, %v427, %v431
    %434 = vst.msk [vmem:[#allocation2 + $0x8] sm:$0x3] %vm350, %v433
    %v435 = vmul.f32 %v216, %v418
    %v436 = vmul.f32 %v328, %v426
    %v437 = vsub.f32 %v435, %v436
    %v438 = vrot.slane %v97, 2
    %v440 = vadd.f32 %v437, %v438
    %v441 = vmul.f32 %v216, %v426
    %v442 = vmul.f32 %v328, %v418
    %v443 = vadd.f32 %v441, %v442
    %444 = vrot.lane.b32.xlu0 %v438, 96
    %v445 = vpop.permute.xlu0 %444
    %v447 = vadd.f32 %v443, %v445
    %v448 = vmul.f32 %v332, %v440
    %v449 = vmul.f32 %v332, %v447
    %451 = vrot.lane.b32.xlu0 %v449, 32
    %v452 = vpop.permute.xlu0 %451
    %v454 = vsel %vm55, %v448, %v452
    %455 = vst.msk [vmem:[#allocation2 + $0xa] sm:$0x3] %vm350, %v454
    %v456 = vmul.f32 %v216, %v440
    %v457 = vmul.f32 %v328, %v447
    %v458 = vsub.f32 %v456, %v457
    %v459 = vrot.slane %v97, 4
    %v461 = vadd.f32 %v458, %v459
    %v462 = vmul.f32 %v216, %v447
    %v463 = vmul.f32 %v328, %v440
    %v464 = vadd.f32 %v462, %v463
    %465 = vrot.lane.b32.xlu0 %v459, 96
    %v466 = vpop.permute.xlu0 %465
    %v468 = vadd.f32 %v464, %v466
    %v469 = vmul.f32 %v332, %v461
    %v470 = vmul.f32 %v332, %v468
    %472 = vrot.lane.b32.xlu0 %v470, 32
    %v473 = vpop.permute.xlu0 %472
    %v475 = vsel %vm55, %v469, %v473
    %476 = vst.msk [vmem:[#allocation2 + $0xc] sm:$0x3] %vm350, %v475
    %v477 = vmul.f32 %v216, %v461
    %v478 = vmul.f32 %v328, %v468
    %v479 = vsub.f32 %v477, %v478
    %v480 = vrot.slane %v97, 6
    %v482 = vadd.f32 %v479, %v480
    %v483 = vmul.f32 %v216, %v468
    %v484 = vmul.f32 %v328, %v461
    %v485 = vadd.f32 %v483, %v484
    %486 = vrot.lane.b32.xlu0 %v480, 96
    %v487 = vpop.permute.xlu0 %486
    %v489 = vadd.f32 %v485, %v487
    %v490 = vmul.f32 %v332, %v482
    %v491 = vmul.f32 %v332, %v489
    %493 = vrot.lane.b32.xlu0 %v491, 32
    %v494 = vpop.permute.xlu0 %493
    %v496 = vsel %vm55, %v490, %v494
    %497 = vst.msk [vmem:[#allocation2 + $0xe] sm:$0x3] %vm350, %v496
    %v498 = vld [vmem:[#allocation2] sm:$0xff]
    %v499 = vld [vmem:[#allocation2 + $0x8] sm:$0xff]
    %v500 = vpack.c.bf16 %v499, %v498
    %v501 = vld [vmem:[%s3] sm:$0xf]
    %v502 = vld [vmem:[%s3 + $0x4] sm:$0xf]
    %v503 = vld [vmem:[%s3 + $0x8] sm:$0xf]
    %v504 = vld [vmem:[%s3 + $0xc] sm:$0xf]
    %v505 = vld [vmem:[%s3 + $0x10] sm:$0xf]
    %v506 = vld [vmem:[%s3 + $0x14] sm:$0xf]
    %v507 = vld [vmem:[%s3 + $0x18] sm:$0xf]
    %v508 = vld [vmem:[%s3 + $0x1c] sm:$0xf]
    %v509 = vld [vmem:[%s4] sm:$0x1]
    %v511 = vlaneseq
    %v512 = vshrl.u32 %v511, 7
    %v513 = vsub.s32 0, %v512
    %v514 = vrot.slane %v509, %v513
    %v524 = vunpack.c.l.b16 %v501
    %v525 = vunpack.c.l.b16 %v502
    %v526 = vunpack.c.l.b16 %v503
    %v527 = vunpack.c.l.b16 %v504
    %v528 = vunpack.c.l.b16 %v505
    %v529 = vunpack.c.l.b16 %v506
    %v530 = vunpack.c.l.b16 %v507
    %v531 = vunpack.c.l.b16 %v508
    %v532 = vpack.c.b16 %v525, %v524
    %v533 = vpack.c.b16 %v527, %v526
    %v534 = vpack.c.b16 %v529, %v528
    %v535 = vpack.c.b16 %v531, %v530
    %vm540 = vcmask 523264
    %v542 = vsel %vm540, %v500, 0
    %544 = vmatprep.subr.bf16.mxu0 0
    %545 = vmatpush1.bf16.msra.mxu0 0
    %546 = vmatprep.subr.bf16.mxu0 0
    %547 = vmatpush1.bf16.msra.mxu0 0
    %548 = vmatprep.subr.bf16.mxu0 0
    %549 = vmatpush1.bf16.msra.mxu0 0
    %550 = vmatprep.subr.bf16.mxu0 0
    %551 = vmatpush1.bf16.msra.mxu0 0
    %552 = vmatprep.subr.bf16.mxu0 0
    %553 = vmatpush1.bf16.msra.mxu0 %v535
    %554 = vmatprep.subr.bf16.mxu0 0
    %555 = vmatpush1.bf16.msra.mxu0 %v534
    %556 = vmatprep.subr.bf16.mxu0 0
    %557 = vmatpush1.bf16.msra.mxu0 %v533
    %558 = vmatprep.subr.bf16.mxu0 0
    %559 = vmatpush1.bf16.msra.mxu0 %v532
    %560 = vmatprep.subr.bf16.mxu0 0
    %561 = vmatpush2.bf16.msra.mxu0 0
    %562 = vmatprep.subr.bf16.mxu0 0
    %563 = vmatpush2.bf16.msra.mxu0 0
    %564 = vmatprep.subr.bf16.mxu0 0
    %565 = vmatpush2.bf16.msra.mxu0 0
    %566 = vmatprep.subr.bf16.mxu0 0
    %567 = vmatpush2.bf16.msra.mxu0 0
    %568 = vmatprep.subr.bf16.mxu0 0
    %569 = vmatpush2.bf16.msra.mxu0 0
    %570 = vmatprep.subr.bf16.mxu0 0
    %571 = vmatpush2.bf16.msra.mxu0 0
    %572 = vmatprep.subr.bf16.mxu0 0
    %573 = vmatpush2.bf16.msra.mxu0 0
    %574 = vmatprep.subr.bf16.mxu0 0
    %575 = vmatpush2.bf16.msra.mxu0 0
    %576 = vmatprep.mubr.bf16.mxu0 0
    %577 = vmatmul.mubr.bf16.gmra.mxu0 %v542
    %v578 = vpop.f32.mrf.mxu0
    %v579 = vadd.f32 %v514, %v578
    %v580 = vpop.f32.mrf.mxu0
    %v581 = vpop.f32.mrf.mxu0
    %v582 = vadd.f32 %v514, %v581
    %v583 = vpop.f32.mrf.mxu0
    %584 = vdwg.mxu0
    %v587 = vcombine.high %v579, %v579
    %v589 = vunpack.c.l.s4 1983009808
    %v590 = vunpack.c.0.s8 %v589
    %v591 = vlaneseq
    %v592 = vshrl.u32 %v591, 7
    %v593 = vsub.s32 %v590, %v592
    %v594 = vrot.slane %v579, %v593
    %v596 = vunpack.c.l.s4 1983009808
    %v597 = vunpack.c.0.s8 %v596
    %v598 = vlaneseq
    %v599 = vshrl.u32 %v598, 7
    %v600 = vsub.s32 %v597, %v599
    %v601 = vrot.slane %v587, %v600
    %v602 = vcombine.high %v594, %v594
    %v603 = vcombine.high %v601, %v601
    %v604 = vcombine.high %v582, %v582
    %v606 = vunpack.c.l.s4 1983009808
    %v607 = vunpack.c.0.s8 %v606
    %v608 = vlaneseq
    %v609 = vshrl.u32 %v608, 7
    %v610 = vsub.s32 %v607, %v609
    %v611 = vrot.slane %v582, %v610
    %v613 = vunpack.c.l.s4 1983009808
    %v614 = vunpack.c.0.s8 %v613
    %v615 = vlaneseq
    %v616 = vshrl.u32 %v615, 7
    %v617 = vsub.s32 %v614, %v616
    %v618 = vrot.slane %v604, %v617
    %v619 = vcombine.high %v611, %v611
    %v620 = vcombine.high %v618, %v618
    %vm629 = vcmask 254976
    %v630 = vsel %vm629, %v594, -inf
    %v631 = vrot.slane %v630, 4
    %v632 = vmax.f32 %v630, %v631
    %v633 = vrot.slane %v632, 2
    %v634 = vmax.f32 %v632, %v633
    %v635 = vrot.slane %v634, 1
    %v636 = vmax.f32 %v634, %v635
    %v637 = vsel %vm629, %v602, -inf
    %v638 = vrot.slane %v637, 4
    %v639 = vmax.f32 %v637, %v638
    %v640 = vrot.slane %v639, 2
    %v641 = vmax.f32 %v639, %v640
    %v642 = vrot.slane %v641, 1
    %v643 = vmax.f32 %v641, %v642
    %v644 = vsel %vm629, %v601, -inf
    %v645 = vrot.slane %v644, 4
    %v646 = vmax.f32 %v644, %v645
    %v647 = vrot.slane %v646, 2
    %v648 = vmax.f32 %v646, %v647
    %v649 = vrot.slane %v648, 1
    %v650 = vmax.f32 %v648, %v649
    %v651 = vsel %vm629, %v603, -inf
    %v652 = vrot.slane %v651, 4
    %v653 = vmax.f32 %v651, %v652
    %v654 = vrot.slane %v653, 2
    %v655 = vmax.f32 %v653, %v654
    %v656 = vrot.slane %v655, 1
    %v657 = vmax.f32 %v655, %v656
    %v658 = vsel %vm629, %v611, -inf
    %v659 = vrot.slane %v658, 4
    %v660 = vmax.f32 %v658, %v659
    %v661 = vrot.slane %v660, 2
    %v662 = vmax.f32 %v660, %v661
    %v663 = vrot.slane %v662, 1
    %v664 = vmax.f32 %v662, %v663
    %v665 = vsel %vm629, %v619, -inf
    %v666 = vrot.slane %v665, 4
    %v667 = vmax.f32 %v665, %v666
    %v668 = vrot.slane %v667, 2
    %v669 = vmax.f32 %v667, %v668
    %v670 = vrot.slane %v669, 1
    %v671 = vmax.f32 %v669, %v670
    %v672 = vsel %vm629, %v618, -inf
    %v673 = vrot.slane %v672, 4
    %v674 = vmax.f32 %v672, %v673
    %v675 = vrot.slane %v674, 2
    %v676 = vmax.f32 %v674, %v675
    %v677 = vrot.slane %v676, 1
    %v678 = vmax.f32 %v676, %v677
    %v679 = vsel %vm629, %v620, -inf
    %v680 = vrot.slane %v679, 4
    %v681 = vmax.f32 %v679, %v680
    %v682 = vrot.slane %v681, 2
    %v683 = vmax.f32 %v681, %v682
    %v684 = vrot.slane %v683, 1
    %v685 = vmax.f32 %v683, %v684
    %v686 = vsub.f32 %v594, %v636
    %v687 = vsub.f32 %v602, %v643
    %v688 = vsub.f32 %v601, %v650
    %v689 = vsub.f32 %v603, %v657
    %v690 = vsub.f32 %v611, %v664
    %v691 = vsub.f32 %v619, %v671
    %v692 = vsub.f32 %v618, %v678
    %v693 = vsub.f32 %v620, %v685
    %v694 = vmul.f32 %v686, 1.442695
    %v695 = vpow.pop %v694
    %v696 = vmul.f32 %v687, 1.442695
    %v697 = vpow.pop %v696
    %v698 = vmul.f32 %v688, 1.442695
    %v699 = vpow.pop %v698
    %v700 = vmul.f32 %v689, 1.442695
    %v701 = vpow.pop %v700
    %v702 = vmul.f32 %v690, 1.442695
    %v703 = vpow.pop %v702
    %v704 = vmul.f32 %v691, 1.442695
    %v705 = vpow.pop %v704
    %v706 = vmul.f32 %v692, 1.442695
    %v707 = vpow.pop %v706
    %v708 = vmul.f32 %v693, 1.442695
    %v709 = vpow.pop %v708
    %v710 = vsel %vm629, %v695, 0.0
    %v711 = vrot.slane %v710, 4
    %v712 = vadd.f32 %v710, %v711
    %v713 = vrot.slane %v712, 2
    %v714 = vadd.f32 %v712, %v713
    %v715 = vrot.slane %v714, 1
    %v716 = vadd.f32 %v714, %v715
    %v717 = vsel %vm629, %v697, 0.0
    %v718 = vrot.slane %v717, 4
    %v719 = vadd.f32 %v717, %v718
    %v720 = vrot.slane %v719, 2
    %v721 = vadd.f32 %v719, %v720
    %v722 = vrot.slane %v721, 1
    %v723 = vadd.f32 %v721, %v722
    %v724 = vsel %vm629, %v699, 0.0
    %v725 = vrot.slane %v724, 4
    %v726 = vadd.f32 %v724, %v725
    %v727 = vrot.slane %v726, 2
    %v728 = vadd.f32 %v726, %v727
    %v729 = vrot.slane %v728, 1
    %v730 = vadd.f32 %v728, %v729
    %v731 = vsel %vm629, %v701, 0.0
    %v732 = vrot.slane %v731, 4
    %v733 = vadd.f32 %v731, %v732
    %v734 = vrot.slane %v733, 2
    %v735 = vadd.f32 %v733, %v734
    %v736 = vrot.slane %v735, 1
    %v737 = vadd.f32 %v735, %v736
    %v738 = vsel %vm629, %v703, 0.0
    %v739 = vrot.slane %v738, 4
    %v740 = vadd.f32 %v738, %v739
    %v741 = vrot.slane %v740, 2
    %v742 = vadd.f32 %v740, %v741
    %v743 = vrot.slane %v742, 1
    %v744 = vadd.f32 %v742, %v743
    %v745 = vsel %vm629, %v705, 0.0
    %v746 = vrot.slane %v745, 4
    %v747 = vadd.f32 %v745, %v746
    %v748 = vrot.slane %v747, 2
    %v749 = vadd.f32 %v747, %v748
    %v750 = vrot.slane %v749, 1
    %v751 = vadd.f32 %v749, %v750
    %v752 = vsel %vm629, %v707, 0.0
    %v753 = vrot.slane %v752, 4
    %v754 = vadd.f32 %v752, %v753
    %v755 = vrot.slane %v754, 2
    %v756 = vadd.f32 %v754, %v755
    %v757 = vrot.slane %v756, 1
    %v758 = vadd.f32 %v756, %v757
    %v759 = vsel %vm629, %v709, 0.0
    %v760 = vrot.slane %v759, 4
    %v761 = vadd.f32 %v759, %v760
    %v762 = vrot.slane %v761, 2
    %v763 = vadd.f32 %v761, %v762
    %v764 = vrot.slane %v763, 1
    %v765 = vadd.f32 %v763, %v764
    %v766 = vrcp.pop %v716
    %v767 = vrcp.pop %v723
    %v768 = vrcp.pop %v730
    %v769 = vrcp.pop %v737
    %v770 = vrcp.pop %v744
    %v771 = vrcp.pop %v751
    %v772 = vrcp.pop %v758
    %v773 = vrcp.pop %v765
    %v774 = vmul.f32 %v695, %v766
    %v775 = vmul.f32 %v697, %v767
    %v776 = vmul.f32 %v699, %v768
    %v777 = vmul.f32 %v701, %v769
    %v778 = vmul.f32 %v703, %v770
    %v779 = vmul.f32 %v705, %v771
    %v780 = vmul.f32 %v707, %v772
    %v781 = vmul.f32 %v709, %v773
    %782 = vst.msk [vmem:[#allocation3] sm:$0x3] %vm629, %v774
    %783 = vst.msk [vmem:[#allocation3 + $0x2] sm:$0x3] %vm629, %v775
    %784 = vst.msk [vmem:[#allocation3 + $0x4] sm:$0x3] %vm629, %v776
    %785 = vst.msk [vmem:[#allocation3 + $0x6] sm:$0x3] %vm629, %v777
    %786 = vst.msk [vmem:[#allocation3 + $0x8] sm:$0x3] %vm629, %v778
    %787 = vst.msk [vmem:[#allocation3 + $0xa] sm:$0x3] %vm629, %v779
    %788 = vst.msk [vmem:[#allocation3 + $0xc] sm:$0x3] %vm629, %v780
    %789 = vst.msk [vmem:[#allocation3 + $0xe] sm:$0x3] %vm629, %v781
    // Predicated region
    $region26: #{tpu_custom_call.1} parent=1 // pred_check
      _
    $region27: #{tpu_custom_call.1} parent=1 // pred_check_branch
      %791 = sbr.rel (0) target = $region29
    $region28: #{tpu_custom_call.1} parent=1 // pred_region
      %s793 = ssub.s32 256, 256
      %794 = vsyncadd [#allocation4], %s793
      %s795 = sshll.u32 [#allocation3], 4
      %s796 = int_to_ptr.vmem [resolvable:$true] %s795
      %801 = dma.vmem_to_hbm [thread:$0]  %s796, 256, %s6, [#allocation4], 32, 32, 2
    $region29: #{tpu_custom_call.1} parent=1 // pred_fallthru
      _
    // Predicated region
    $region30: #{tpu_custom_call.1} parent=1 // pred_check
      _
    $region31: #{tpu_custom_call.1} parent=1 // pred_check_branch
      %803 = sbr.rel (0) target = $region33
    $region32: #{tpu_custom_call.1} parent=1 // pred_region
      %804 = dma.done [#allocation4], 256
    $region33: #{tpu_custom_call.1} parent=1 // pred_fallthru
      _
    %805 = vsyncpa [#allocation4], 1

</llo_original>
